<compile_context>
chip_gen: v5e
topology: v5e:2x2
jax: 0.10.0
libtpu: 0.0.40
codegen_flags: <defaults>
</compile_context>

<pallas_src>
import functools
import math

import jax
import jax.numpy as jnp
from jax.experimental import pallas as pl
from jax.experimental.pallas import tpu as pltpu


# Fixed architecture of the PyTorch module (all convs: k=4, stride=2, pad=1).
_CONV_LAYERS = [
    # name      Cin  Cout  bn     act
    ("conv0",     3,   64, False, "leaky"),
    ("conv1",    64,  128, True,  "leaky"),
    ("conv2",   128,  256, True,  "leaky"),
    ("conv3",   256,  512, True,  "leaky"),
]
_DECONV_LAYERS = [
    ("deconv0", 512,  256, True,  "relu"),
    ("deconv1", 256,  128, True,  "relu"),
    ("deconv2", 128,   64, True,  "relu"),
    ("deconv3",  64,    3, False, "tanh"),
]
_BN_OF = {"conv1": "bn1", "conv2": "bn2", "conv3": "bn3",
          "deconv0": "bn4", "deconv1": "bn5", "deconv2": "bn6"}
_EPS = 1e-5


def _round_up(x, m):
    return ((x + m - 1) // m) * m


# ---------------------------------------------------------------------------
# Live-tap selection (drops kernel taps that only ever read the zero-pad ring)
# ---------------------------------------------------------------------------
def _conv_live_taps(H, W, k=4, stride=2, pad=1):
    Ho = (H + 2 * pad - k) // stride + 1
    Wo = (W + 2 * pad - k) // stride + 1

    def live(kk, n_out, n_in):
        return any(pad <= kk + stride * t < pad + n_in for t in range(n_out))

    taps = tuple((ki, kj) for ki in range(k) for kj in range(k)
                 if live(ki, Ho, H) and live(kj, Wo, W))
    return taps, Ho, Wo


def _deconv_live_taps(H, W, ry, rx):
    # Per sub-pixel phase (ry, rx): 2x2 stride-1 taps over an input padded by 1.
    def live(start, n):
        return any(1 <= start + t < 1 + n for t in range(n))

    return tuple((dy, dx) for dy in range(2) for dx in range(2)
                 if live(ry + dy, H) and live(rx + dx, W))


# ---------------------------------------------------------------------------
# Fused Pallas kernel: (P, M, K) x (P, K, C) -> +bias -> [BN over (P, M)] -> act
# Single resident invocation per block; result written directly to o_ref.
# ---------------------------------------------------------------------------
def _fused_layer_kernel(p_ref, w_ref, b_ref, *rest, act, bn, eps):
    if bn:
        g_ref, be_ref, o_ref = rest
    else:
        (o_ref,) = rest

    # bf16 x bf16 -> f32 accumulate on the MXU (batched over the phase dim).
    y = jnp.einsum("pmk,pkc->pmc", p_ref[...], w_ref[...],
                   preferred_element_type=jnp.float32)
    y = y + b_ref[...]
    if bn:
        denom = float(y.shape[0] * y.shape[1])
        mean = jnp.sum(y, axis=(0, 1), keepdims=True) / denom
        d = y - mean
        var = jnp.sum(d * d, axis=(0, 1), keepdims=True) / denom  # biased (PyTorch fwd)
        y = d * jax.lax.rsqrt(var + eps) * g_ref[...] + be_ref[...]
    if act == "leaky":
        y = jnp.where(y >= 0, y, 0.2 * y)
    elif act == "relu":
        y = jnp.maximum(y, 0.0)
    elif act == "tanh":
        y = jnp.tanh(y)
    o_ref[...] = y


def _fused_layer(patches, w3, bias, gamma=None, beta=None, *, act, eps=_EPS):
    """patches: (P, M, K) bf16. w3: (P, K, Cpad) bf16 (pre-packed).
    bias/gamma/beta: (1, 1, Cpad) f32 (pre-packed). Returns (P, M, Cpad) f32."""
    P, M, K = patches.shape
    Cpad = w3.shape[2]
    bn = gamma is not None

    if bn:
        # BN statistics pool over all (P, M): single resident invocation.
        grid = (1,)
        p_spec = pl.BlockSpec((P, M, K), lambda i: (0, 0, 0))
        w_spec = pl.BlockSpec((P, K, Cpad), lambda i: (0, 0, 0))
        o_spec = pl.BlockSpec((P, M, Cpad), lambda i: (0, 0, 0))
        semantics = ("arbitrary",)
    elif P > 1:
        # No BN: sub-pixel phases are independent -> parallel (2nd TC on v7x).
        grid = (P,)
        p_spec = pl.BlockSpec((1, M, K), lambda i: (i, 0, 0))
        w_spec = pl.BlockSpec((1, K, Cpad), lambda i: (i, 0, 0))
        o_spec = pl.BlockSpec((1, M, Cpad), lambda i: (i, 0, 0))
        semantics = ("parallel",)
    else:
        # No BN, single phase: split M into 2 parallel tiles when possible.
        nm = 2 if (M % 16 == 0 and M >= 16) else 1
        mt = M // nm
        grid = (nm,)
        p_spec = pl.BlockSpec((1, mt, K), lambda i: (0, i, 0))
        w_spec = pl.BlockSpec((1, K, Cpad), lambda i: (0, 0, 0))
        o_spec = pl.BlockSpec((1, mt, Cpad), lambda i: (0, i, 0))
        semantics = ("parallel",)

    vec_spec = pl.BlockSpec((1, 1, Cpad), lambda i: (0, 0, 0))
    operands = [patches, w3, bias]
    in_specs = [p_spec, w_spec, vec_spec]
    if bn:
        operands += [gamma, beta]
        in_specs += [vec_spec, vec_spec]

    return pl.pallas_call(
        functools.partial(_fused_layer_kernel, act=act, bn=bn, eps=eps),
        out_shape=jax.ShapeDtypeStruct((P, M, Cpad), jnp.float32),
        grid_spec=pltpu.PrefetchScalarGridSpec(
            num_scalar_prefetch=0,
            grid=grid,
            in_specs=in_specs,
            out_specs=o_spec),
        compiler_params=pltpu.CompilerParams(dimension_semantics=semantics),
    )(*operands)


# ---------------------------------------------------------------------------
# One-time weight packing (done at param-prep time, NOT per forward)
# ---------------------------------------------------------------------------
def _pack_conv_layer(w, b, H, W):
    """w: (Cout, Cin, 4, 4) PyTorch Conv2d -> (1, K, Cpad) bf16; b -> (1,1,Cpad) f32."""
    cout = w.shape[0]
    taps, _, _ = _conv_live_taps(H, W)
    wk = jnp.concatenate([w[:, :, ki, kj].T for ki, kj in taps], axis=0)  # (K, Cout)
    cpad = _round_up(cout, 128)
    wk = jnp.pad(wk, ((0, 0), (0, cpad - cout)))
    bias = jnp.pad(b, (0, cpad - cout)).reshape(1, 1, cpad).astype(jnp.float32)
    return wk[None].astype(jnp.bfloat16), bias


def _pack_deconv_layer(w, b, H, W):
    """w: (Cin, Cout, 4, 4) PyTorch ConvTranspose2d -> (4, K, Cpad) bf16 per phase."""
    cout = w.shape[1]
    cpad = _round_up(cout, 128)
    w_phases = []
    for ry in range(2):
        for rx in range(2):
            taps = _deconv_live_taps(H, W, ry, rx)
            wk = jnp.concatenate(
                [w[:, :, 3 - ry - 2 * dy, 3 - rx - 2 * dx] for dy, dx in taps],
                axis=0)                                         # (len*Cin, Cout)
            w_phases.append(jnp.pad(wk, ((0, 0), (0, cpad - cout))))
    assert len({p.shape[0] for p in w_phases}) == 1
    bias = jnp.pad(b, (0, cpad - cout)).reshape(1, 1, cpad).astype(jnp.float32)
    return jnp.stack(w_phases, axis=0).astype(jnp.bfloat16), bias


def _pack_bn(g, b, cout):
    cpad = _round_up(cout, 128)
    return (jnp.pad(g, (0, cpad - cout)).reshape(1, 1, cpad).astype(jnp.float32),
            jnp.pad(b, (0, cpad - cout)).reshape(1, 1, cpad).astype(jnp.float32))


def prepare_params(params, *, hw):
    """One-time packing of PyTorch-layout params for the Pallas forward."""
    packed = {}
    h = hw
    for name, _, cout, bn, _ in _CONV_LAYERS:
        packed[name + "_w"], packed[name + "_b"] = _pack_conv_layer(
            params[name + "_w"], params[name + "_b"], h, h)
        if bn:
            bnn = _BN_OF[name]
            packed[name + "_g"], packed[name + "_bt"] = _pack_bn(
                params[bnn + "_g"], params[bnn + "_b"], cout)
        h = (h + 2 - 4) // 2 + 1
    for name, _, cout, bn, _ in _DECONV_LAYERS:
        packed[name + "_w"], packed[name + "_b"] = _pack_deconv_layer(
            params[name + "_w"], params[name + "_b"], h, h)
        if bn:
            bnn = _BN_OF[name]
            packed[name + "_g"], packed[name + "_bt"] = _pack_bn(
                params[bnn + "_g"], params[bnn + "_b"], cout)
        h = 2 * h
    return packed


# ---------------------------------------------------------------------------
# Layer wrappers (NHWC layout plumbing only; all math is in the Pallas kernel)
# ---------------------------------------------------------------------------
def conv2d_block(x, w3, bias, gamma=None, beta=None, *, cout, act):
    # x: NHWC.  w3/bias/gamma/beta pre-packed by _pack_conv_layer/_pack_bn.
    N, H, W, C = x.shape
    taps, Ho, Wo = _conv_live_taps(H, W)
    xp = jnp.pad(x, ((0, 0), (1, 1), (1, 1), (0, 0)))
    cols = jnp.concatenate(
        [xp[:, ki:ki + 2 * Ho:2, kj:kj + 2 * Wo:2, :] for ki, kj in taps],
        axis=-1)                                               # (N, Ho, Wo, T*C)
    patches = cols.reshape(1, N * Ho * Wo, len(taps) * C).astype(jnp.bfloat16)
    assert patches.shape[2] == w3.shape[1], (patches.shape, w3.shape)
    y = _fused_layer(patches, w3, bias, gamma, beta, act=act)
    return y[0, :, :cout].reshape(N, Ho, Wo, cout)


def conv_transpose2d_block(x, w3, bias, gamma=None, beta=None, *, cout, act):
    # Sub-pixel (4-phase) decomposition of ConvTranspose2d(k=4, s=2, p=1):
    # output pixel (2i+ry, 2j+rx) is a stride-1 2x2 conv of the input with a
    # phase-specific kernel slice; dead zero-pad taps are dropped per phase.
    N, H, W, C = x.shape
    xp = jnp.pad(x, ((0, 0), (1, 1), (1, 1), (0, 0)))
    phases = []
    for ry in range(2):
        for rx in range(2):
            taps = _deconv_live_taps(H, W, ry, rx)
            cols = jnp.concatenate(
                [xp[:, ry + dy:ry + dy + H, rx + dx:rx + dx + W, :]
                 for dy, dx in taps], axis=-1)
            phases.append(cols.reshape(N * H * W, len(taps) * C))
    assert len({p.shape[-1] for p in phases}) == 1
    patches = jnp.stack(phases, axis=0).astype(jnp.bfloat16)   # (4, M, K)
    assert patches.shape[2] == w3.shape[1], (patches.shape, w3.shape)
    y = _fused_layer(patches, w3, bias, gamma, beta, act=act)
    y = y[:, :, :cout]                                         # (4, M, Cout)
    # Interleave phases: y[ry*2+rx, n*H*W+i*W+j, c] -> out[n, 2i+ry, 2j+rx, c]
    y = y.reshape(2, 2, N, H, W, cout).transpose(2, 3, 0, 4, 1, 5)
    return y.reshape(N, 2 * H, 2 * W, cout)


# ---------------------------------------------------------------------------
# Parameters (deterministic, PyTorch-default-style init; raw PyTorch layouts)
# ---------------------------------------------------------------------------
def init_params(key):
    k = 4
    params = {}
    conv_shapes = [(64, 3), (128, 64), (256, 128), (512, 256)]      # (C_out, C_in)
    deconv_shapes = [(512, 256), (256, 128), (128, 64), (64, 3)]    # (C_in, C_out)
    keys = jax.random.split(key, 16)
    i = 0
    for idx, (co, ci) in enumerate(conv_shapes):
        bound = 1.0 / math.sqrt(ci * k * k)
        params[f"conv{idx}_w"] = jax.random.uniform(
            keys[i], (co, ci, k, k), jnp.float32, -bound, bound); i += 1
        params[f"conv{idx}_b"] = jax.random.uniform(
            keys[i], (co,), jnp.float32, -bound, bound); i += 1
    for idx, (ci, co) in enumerate(deconv_shapes):
        bound = 1.0 / math.sqrt(ci * k * k)
        params[f"deconv{idx}_w"] = jax.random.uniform(
            keys[i], (ci, co, k, k), jnp.float32, -bound, bound); i += 1
        params[f"deconv{idx}_b"] = jax.random.uniform(
            keys[i], (co,), jnp.float32, -bound, bound); i += 1
    # BatchNorm2d defaults: gamma=1, beta=0
    for name, c in [("bn1", 128), ("bn2", 256), ("bn3", 512),
                    ("bn4", 256), ("bn5", 128), ("bn6", 64)]:
        params[name + "_g"] = jnp.ones((c,), jnp.float32)
        params[name + "_b"] = jnp.zeros((c,), jnp.float32)
    return params


# ---------------------------------------------------------------------------
# Forward pass == GenNNSkeToImage.forward (NCHW in / NCHW out)
# ---------------------------------------------------------------------------
def gen_nn_ske_to_image(packed, x):
    h = jnp.transpose(x, (0, 2, 3, 1))                       # NCHW -> NHWC once
    for name, _, cout, bn, act in _CONV_LAYERS:
        g = packed[name + "_g"] if bn else None
        bt = packed[name + "_bt"] if bn else None
        h = conv2d_block(h, packed[name + "_w"], packed[name + "_b"],
                         g, bt, cout=cout, act=act)
    for name, _, cout, bn, act in _DECONV_LAYERS:
        g = packed[name + "_g"] if bn else None
        bt = packed[name + "_bt"] if bn else None
        h = conv_transpose2d_block(h, packed[name + "_w"], packed[name + "_b"],
                                   g, bt, cout=cout, act=act)
    return jnp.transpose(h, (0, 3, 1, 2))                    # NHWC -> NCHW once


# ---------------------------------------------------------------------------
# Geometry parity checks vs lax.conv_general_dilated (bf16 inputs both sides,
# no BN so the tiny-batch BN near-tie pathology cannot amplify rounding).
# ---------------------------------------------------------------------------
def _reference_conv(x, w, b):
    y = jax.lax.conv_general_dilated(
        x.astype(jnp.bfloat16), w.astype(jnp.bfloat16),
        window_strides=(2, 2), padding=((1, 1), (1, 1)),
        dimension_numbers=("NCHW", "OIHW", "NCHW"),
        preferred_element_type=jnp.float32)
    return y + b[None, :, None, None]


def _reference_deconv(x, w, b):
    wt = jnp.flip(jnp.transpose(w, (1, 0, 2, 3)), axis=(2, 3))
    y = jax.lax.conv_general_dilated(
        x.astype(jnp.bfloat16), wt.astype(jnp.bfloat16),
        window_strides=(1, 1), padding=((2, 2), (2, 2)), lhs_dilation=(2, 2),
        dimension_numbers=("NCHW", "OIHW", "NCHW"),
        preferred_element_type=jnp.float32)
    return y + b[None, :, None, None]


def _check_geometry(key):
    for h, cin, cout in [(16, 3, 8), (2, 8, 16)]:           # all-tap / dead-tap conv
        key, k1, k2, k3 = jax.random.split(key, 4)
        x = jax.random.normal(k1, (2, cin, h, h), jnp.float32)
        w = 0.1 * jax.random.normal(k2, (cout, cin, 4, 4), jnp.float32)
        b = 0.1 * jax.random.normal(k3, (cout,), jnp.float32)
        w3, bias = _pack_conv_layer(w, b, h, h)
        got = conv2d_block(jnp.transpose(x, (0, 2, 3, 1)), w3, bias,
                           cout=cout, act="none")
        got = jnp.transpose(got, (0, 3, 1, 2))
        assert bool(jnp.allclose(got, _reference_conv(x, w, b),
                                 atol=2e-2, rtol=2e-2))
    for h, cin, cout in [(4, 8, 4), (1, 16, 8)]:            # all-tap / dead-tap deconv
        key, k1, k2, k3 = jax.random.split(key, 4)
        x = jax.random.normal(k1, (2, cin, h, h), jnp.float32)
        w = 0.1 * jax.random.normal(k2, (cin, cout, 4, 4), jnp.float32)
        b = 0.1 * jax.random.normal(k3, (cout,), jnp.float32)
        w3, bias = _pack_deconv_layer(w, b, h, h)
        got = conv_transpose2d_block(jnp.transpose(x, (0, 2, 3, 1)), w3, bias,
                                     cout=cout, act="none")
        got = jnp.transpose(got, (0, 3, 1, 2))
        assert bool(jnp.allclose(got, _reference_deconv(x, w, b),
                                 atol=2e-2, rtol=2e-2))


if __name__ == "__main__":
    key = jax.random.PRNGKey(0)
    kp, kx, kc = jax.random.split(key, 3)

    _check_geometry(kc)                       # validate packing/decomposition

    params = init_params(kp)
    packed = prepare_params(params, hw=16)    # one-time weight packing (bf16)

    # Input: NCHW, (batch=2, channels=3, 16, 16) -- 16 = 2^4 so the 4 stride-2
    # convs reach 1x1 and the 4 transposed convs recover 16x16.
    x = jax.random.normal(kx, (2, 3, 16, 16), jnp.float32)

    fwd = jax.jit(gen_nn_ske_to_image)
    out = jax.block_until_ready(fwd(packed, x))

    assert out.shape == (2, 3, 16, 16), out.shape
    assert out.dtype == jnp.float32
    assert bool(jnp.all(jnp.isfinite(out)))
    assert bool(jnp.all(jnp.abs(out) <= 1.0))  # tanh output range
    print("KERNEL_OK")
</pallas_src>

<mosaic_0001>
module attributes {stable_mosaic.version = 11 : i64} {
  func.func @_fused_layer_kernel(%arg0: i32, %arg1: memref<1x64x48xbf16, #tpu.memory_space<vmem>>, %arg2: memref<1x48x128xbf16, #tpu.memory_space<vmem>>, %arg3: memref<1x1x128xf32, #tpu.memory_space<vmem>>, %arg4: memref<1x64x128xf32, #tpu.memory_space<vmem>>) attributes {dimension_semantics = [#tpu.dimension_semantics<parallel>], iteration_bounds = array<i64: 2>, scalar_prefetch = 0 : i64, scratch_operands = 0 : i64, tpu.core_type = #tpu.core_type<tc>, window_params = [{transform_indices = @transform_0, window_bounds = array<i64: 1, 64, 48>}, {pipeline_mode = #tpu.pipeline_mode<synchronous>, transform_indices = @transform_1, window_bounds = array<i64: 1, 48, 128>}, {pipeline_mode = #tpu.pipeline_mode<synchronous>, transform_indices = @transform_2, window_bounds = array<i64: 1, 1, 128>}, {transform_indices = @transform_3, window_bounds = array<i64: 1, 64, 128>}]} {
    %c0 = arith.constant 0 : index
    %c0_0 = arith.constant 0 : index
    %c0_1 = arith.constant 0 : index
    %0 = vector.load %arg1[%c0, %c0_0, %c0_1] : memref<1x64x48xbf16, #tpu.memory_space<vmem>>, vector<1x64x48xbf16>
    %c0_2 = arith.constant 0 : index
    %c0_3 = arith.constant 0 : index
    %c0_4 = arith.constant 0 : index
    %1 = vector.load %arg2[%c0_2, %c0_3, %c0_4] : memref<1x48x128xbf16, #tpu.memory_space<vmem>>, vector<1x48x128xbf16>
    "tpu.trace_start"() <{level = 10 : i32, message = "pmk,pkc->pmc"}> : () -> ()
    %cst = arith.constant dense<0.000000e+00> : vector<1x64x128xf32>
    %2 = tpu.matmul %0, %1, %cst {dimension_numbers = #tpu.dot_dimension_numbers<[2], [1], [1], [2], [0, 0, 0, 1, 1, 2], [0], [0]>} : vector<1x64x48xbf16>, vector<1x48x128xbf16>, vector<1x64x128xf32> -> vector<1x64x128xf32>
    "tpu.trace_stop"() : () -> ()
    %c0_5 = arith.constant 0 : index
    %c0_6 = arith.constant 0 : index
    %c0_7 = arith.constant 0 : index
    %3 = vector.load %arg3[%c0_5, %c0_6, %c0_7] : memref<1x1x128xf32, #tpu.memory_space<vmem>>, vector<1x1x128xf32>
    %4 = vector.broadcast %3 : vector<1x1x128xf32> to vector<1x64x128xf32>
    %5 = arith.addf %2, %4 : vector<1x64x128xf32>
    %c0_8 = arith.constant 0 : index
    %c0_9 = arith.constant 0 : index
    %c0_10 = arith.constant 0 : index
    %6 = vector.load %arg4[%c0_8, %c0_9, %c0_10] : memref<1x64x128xf32, #tpu.memory_space<vmem>>, vector<1x64x128xf32>
    tpu.vector_store %arg4[%c0_8, %c0_9, %c0_10], %5 {strides = array<i32>} : memref<1x64x128xf32, #tpu.memory_space<vmem>>, vector<1x64x128xf32>,
    return
  }
  func.func @transform_0(%arg0: i32) -> (i32, i32, i32) {
    %c0_i32 = arith.constant 0 : i32
    %c0_i32_0 = arith.constant 0 : i32
    %c0_i32_1 = arith.constant 0 : i32
    return %c0_i32, %arg0, %c0_i32_0 : i32, i32, i32
  }
  func.func @transform_1(%arg0: i32) -> (i32, i32, i32) {
    %c0_i32 = arith.constant 0 : i32
    %c0_i32_0 = arith.constant 0 : i32
    %c0_i32_1 = arith.constant 0 : i32
    %c0_i32_2 = arith.constant 0 : i32
    return %c0_i32, %c0_i32_0, %c0_i32_1 : i32, i32, i32
  }
  func.func @transform_2(%arg0: i32) -> (i32, i32, i32) {
    %c0_i32 = arith.constant 0 : i32
    %c0_i32_0 = arith.constant 0 : i32
    %c0_i32_1 = arith.constant 0 : i32
    %c0_i32_2 = arith.constant 0 : i32
    return %c0_i32, %c0_i32_0, %c0_i32_1 : i32, i32, i32
  }
  func.func @transform_3(%arg0: i32) -> (i32, i32, i32) {
    %c0_i32 = arith.constant 0 : i32
    %c0_i32_0 = arith.constant 0 : i32
    %c0_i32_1 = arith.constant 0 : i32
    return %c0_i32, %arg0, %c0_i32_0 : i32, i32, i32
  }
}

</mosaic_0001>

<llo_original>
// kernel: tpu_custom_call.1
$region0: #{tpu_custom_call.1}
  #allocation0 [shape = 'u32[]', space=smem, size = 0x4, offset = 0x4, fixed_abs, tag = 'smem constant byte address 0x4 - core index']
  #allocation1 [shape = 'u32[72,128]{1,0:T(1,128)}', space=vmem, size = 0x9000, scoped, tag = 'internal scratch']
  %s0 = inlined_call_operand.vmem [shape: bf16[1,128,48], index: 0, kind: input, shape index: {}]
  %s1 = inlined_call_operand.vmem [shape: bf16[1,48,128], index: 1, kind: input, shape index: {}]
  %s2 = inlined_call_operand.vmem [shape: f32[1,1,128], index: 2, kind: input, shape index: {}]
  %s3 = inlined_call_operand.hbm [shape: f32[1,128,128], index: 3, kind: output, shape index: {}]
  %s4 = sld [smem:[#allocation0]]
  $region45: #{tpu_custom_call.1} parent=0
    _
  %s6 = ssub.s32 1, %s4
  %s7 = scalar_select 0, %s6, %s4
  $region1: #{tpu_custom_call.1} parent=0
    #allocation2 [shape = 'u8[65536]{0}', space=vmem, size = 0x10000, scoped, tag = 'output window, operand 0']
    #allocation3 [shape = 's32[2]{0}', space=sflag, size = 0x8, scoped, tag = 'scoped memory for tpu_custom_call.1']
    %8 = vsyncpa [#allocation3], 0
    %s9 = scalar_lea.sflag [#allocation3], 1
    %10 = vsyncpa %s9, 0
    loop: start=0, step=1, limit=4
    $region2: #{tpu_custom_call.1} parent=1 // loop_pre_header
      _
    $region3: #{tpu_custom_call.1} parent=1 // loop_header
      %s12 = sphi 0, %s16
      %p13 = scmp.ge.s32.totalorder %s12, 4
      %s22 = sphi 0, %s24
      %s25 = sphi 0, %s22
      %s26 = sphi 0, %s25
      %s42 = sphi 0, %s26
      %s46 = sphi 0, %s46
      %s48 = sphi 0, %s46
      %s49 = sphi 0, %s48
      %s63 = sphi 0, %s49
      %s67 = sphi 0, %s67
      %s69 = sphi 0, %s67
      %s70 = sphi 0, %s69
      %s84 = sphi 0, %s70
      %s90 = sphi 0, %s92
      %s93 = sphi 0, %s90
      %s94 = sphi 0, %s93
      %s110 = sphi 0, %s94
    $region4: #{tpu_custom_call.1} parent=1 // loop_header_branch
      %15 = sbr.rel (%p13) target = $region8
    $region5: #{tpu_custom_call.1} parent=1 // loop_body
      %s17 = ssub.s32 %s12, 1
      %s18 = ssub.s32 %s12, 2
      %s19 = sadd.s32 %s12, 1
      %s20 = ssub.s32 %s12, %s19
      %p21 = scmp.eq.s32.totalorder %s20, 0
      %s23 = sadd.s32 %s22, 1
      %s24 = scalar_select %p21, %s22, %s23
      %p27 = pneg %p21
      %p28 = scmp.eq.s32.totalorder %s12, 1
      %p29 = por %p27, %p28
      %p30 = scmp.ne.s32.totalorder %s22, %s25
      %p31 = scmp.eq.s32.totalorder %s12, 0
      %p32 = por %p30, %p31
      %p33 = scmp.ne.s32.totalorder %s22, %s25
      %p34 = scmp.eq.s32.totalorder %s17, 1
      %p35 = por %p33, %p34
      %p36 = scmp.ne.s32.totalorder %s25, %s26
      %p37 = scmp.eq.s32.totalorder %s17, 0
      %p38 = por %p36, %p37
      %p39 = scmp.ne.s32.totalorder %s25, %s26
      %p40 = scmp.eq.s32.totalorder %s18, 1
      %p41 = por %p39, %p40
      %p43 = scmp.ne.s32.totalorder %s26, %s42
      %p44 = scmp.eq.s32.totalorder %s18, 0
      %p45 = por %p43, %p44
      %s47 = sadd.s32 %s46, 1
      %p50 = scmp.eq.s32.totalorder %s12, 1
      %p51 = scmp.ne.s32.totalorder %s46, %s48
      %p52 = scmp.eq.s32.totalorder %s12, 0
      %p53 = por %p51, %p52
      %p54 = scmp.ne.s32.totalorder %s46, %s48
      %p55 = scmp.eq.s32.totalorder %s17, 1
      %p56 = por %p54, %p55
      %p57 = scmp.ne.s32.totalorder %s48, %s49
      %p58 = scmp.eq.s32.totalorder %s17, 0
      %p59 = por %p57, %p58
      %p60 = scmp.ne.s32.totalorder %s48, %s49
      %p61 = scmp.eq.s32.totalorder %s18, 1
      %p62 = por %p60, %p61
      %p64 = scmp.ne.s32.totalorder %s49, %s63
      %p65 = scmp.eq.s32.totalorder %s18, 0
      %p66 = por %p64, %p65
      %s68 = sadd.s32 %s67, 1
      %p71 = scmp.eq.s32.totalorder %s12, 1
      %p72 = scmp.ne.s32.totalorder %s67, %s69
      %p73 = scmp.eq.s32.totalorder %s12, 0
      %p74 = por %p72, %p73
      %p75 = scmp.ne.s32.totalorder %s67, %s69
      %p76 = scmp.eq.s32.totalorder %s17, 1
      %p77 = por %p75, %p76
      %p78 = scmp.ne.s32.totalorder %s69, %s70
      %p79 = scmp.eq.s32.totalorder %s17, 0
      %p80 = por %p78, %p79
      %p81 = scmp.ne.s32.totalorder %s69, %s70
      %p82 = scmp.eq.s32.totalorder %s18, 1
      %p83 = por %p81, %p82
      %p85 = scmp.ne.s32.totalorder %s70, %s84
      %p86 = scmp.eq.s32.totalorder %s18, 0
      %p87 = por %p85, %p86
      %s88 = ssub.s32 %s12, %s19
      %p89 = scmp.eq.s32.totalorder %s88, 0
      %s91 = sadd.s32 %s90, 1
      %s92 = scalar_select %p89, %s90, %s91
      %p95 = pneg %p89
      %p96 = scmp.eq.s32.totalorder %s12, 1
      %p97 = por %p95, %p96
      %p98 = scmp.ne.s32.totalorder %s90, %s93
      %p99 = scmp.eq.s32.totalorder %s12, 0
      %p100 = por %p98, %p99
      %p101 = scmp.ne.s32.totalorder %s90, %s93
      %p102 = scmp.eq.s32.totalorder %s17, 1
      %p103 = por %p101, %p102
      %p104 = scmp.ne.s32.totalorder %s93, %s94
      %p105 = scmp.eq.s32.totalorder %s17, 0
      %p106 = por %p104, %p105
      %p107 = scmp.ne.s32.totalorder %s93, %s94
      %p108 = scmp.eq.s32.totalorder %s18, 1
      %p109 = por %p107, %p108
      %p111 = scmp.ne.s32.totalorder %s94, %s110
      %p112 = scmp.eq.s32.totalorder %s18, 0
      %p113 = por %p111, %p112
      %p114 = scmp.le.s32.totalorder 1, %s12
      %p115 = scmp.lt.s32.totalorder %s12, 3
      %p116 = pnand %p114, %p115
      %p117 = pneg %p116
      // Predicated region
      $region9: #{tpu_custom_call.1} parent=5 // pred_check
        _
      $region10: #{tpu_custom_call.1} parent=5 // pred_check_branch
        %119 = sbr.rel (%p116) target = $region12
      $region11: #{tpu_custom_call.1} parent=5 // pred_region
        %s120 = ssub.s32 %s12, 1
        // Predicated region
        $region13: #{tpu_custom_call.1} parent=11 // pred_check
          %p121 = pneg %p59
        $region14: #{tpu_custom_call.1} parent=11 // pred_check_branch
          %123 = sbr.rel (%p121) target = $region16
        $region15: #{tpu_custom_call.1} parent=11 // pred_region
          _
        $region16: #{tpu_custom_call.1} parent=11 // pred_fallthru
          _
        // Predicated region
        $region17: #{tpu_custom_call.1} parent=11 // pred_check
          %p124 = pneg %p80
        $region18: #{tpu_custom_call.1} parent=11 // pred_check_branch
          %126 = sbr.rel (%p124) target = $region20
        $region19: #{tpu_custom_call.1} parent=11 // pred_region
          _
        $region20: #{tpu_custom_call.1} parent=11 // pred_fallthru
          _
      $region12: #{tpu_custom_call.1} parent=5 // pred_fallthru
        _
      %p127 = scmp.lt.s32.totalorder %s12, 2
      // Predicated region
      $region21: #{tpu_custom_call.1} parent=5 // pred_check
        %p128 = pneg %p127
      $region22: #{tpu_custom_call.1} parent=5 // pred_check_branch
        %130 = sbr.rel (%p128) target = $region24
      $region23: #{tpu_custom_call.1} parent=5 // pred_region
        // Predicated region
        $region25: #{tpu_custom_call.1} parent=23 // pred_check
          %p131 = pneg %p32
        $region26: #{tpu_custom_call.1} parent=23 // pred_check_branch
          %133 = sbr.rel (%p131) target = $region28
        $region27: #{tpu_custom_call.1} parent=23 // pred_region
          %s134 = smul.u32 8, %s12
          %p135 = scmp.lt.s32.totalorder %s134, 15
          %s136 = scalar_select %p135, %s134, 15
          %s137 = smul.addr %s136, 4
          %s138 = scalar_lea.vmem %s0, %s137
          %s139 = smul.u32 8, %s12
        $region28: #{tpu_custom_call.1} parent=23 // pred_fallthru
          _
      $region24: #{tpu_custom_call.1} parent=5 // pred_fallthru
        _
      %p140 = scmp.le.s32.totalorder 1, %s12
      %p141 = scmp.lt.s32.totalorder %s12, 3
      %p142 = pnand %p140, %p141
      %p143 = pneg %p142
      // Predicated region
      $region29: #{tpu_custom_call.1} parent=5 // pred_check
        _
      $region30: #{tpu_custom_call.1} parent=5 // pred_check_branch
        %145 = sbr.rel (%p142) target = $region32
      $region31: #{tpu_custom_call.1} parent=5 // pred_region
        %s146 = ssub.s32 %s12, 1
        %s147 = smul.u32 8, %s17
        %p148 = scmp.lt.s32.totalorder %s147, 15
        %s149 = scalar_select %p148, %s147, 15
        %s150 = smul.addr %s149, 4
        %s151 = scalar_lea.vmem %s0, %s150
        %p152 = pneg %p38
        %p153 = pneg %p35
        %p154 = pneg %p59
        %p155 = pneg %p56
        %p156 = pneg %p80
        %p157 = pneg %p77
        %p158 = pneg %p106
        %p159 = pneg %p103
        %s160 = sand.u32 %s93, 1
        %s161 = scalar_lea.sflag [#allocation3], %s160
        %s162 = sand.u32 %s93, 1
        %s163 = smul.addr %s162, 64
        %s164 = scalar_lea.vmem [#allocation2], %s163
        %s165 = smul.u32 8, %s17
        %p166 = scmp.lt.s32.totalorder %s165, 15
        %s167 = scalar_select %p166, %s165, 15
        %s168 = smul.addr %s167, 4
        %s169 = scalar_lea.vmem %s0, %s168
        %s170 = smul.u32 8, %s17
        %s171 = smul.u32 8, %s17
        %v173 = vld [vmem:[%s169] sm:$0xf]
        %v174 = vld [vmem:[%s169 + $0x4] sm:$0xf]
        %v175 = vld [vmem:[%s169 + $0x8] sm:$0xf]
        %v176 = vld [vmem:[%s169 + $0xc] sm:$0xf]
        %v177 = vld [vmem:[%s169 + $0x10] sm:$0xf]
        %v178 = vld [vmem:[%s169 + $0x14] sm:$0xf]
        %v179 = vld [vmem:[%s169 + $0x18] sm:$0xf]
        %v180 = vld [vmem:[%s169 + $0x1c] sm:$0xf]
        %v181 = vld [vmem:[%s1] sm:$0xf]
        %v182 = vld [vmem:[%s1 + $0x4] sm:$0xf]
        %v183 = vld [vmem:[%s1 + $0x8] sm:$0xf]
        %v184 = vld [vmem:[%s1 + $0xc] sm:$0xf]
        %v185 = vld [vmem:[%s1 + $0x10] sm:$0xf]
        %v186 = vld [vmem:[%s1 + $0x14] sm:$0xf]
        %v187 = vld [vmem:[%s2] sm:$0x1]
        %v189 = vperm.slane %v187, 0
        %v199 = vunpack.c.l.b16 %v173
        %v200 = vunpack.c.l.b16 %v174
        %v201 = vunpack.c.l.b16 %v175
        %v202 = vunpack.c.l.b16 %v176
        %v203 = vunpack.c.l.b16 %v177
        %v204 = vunpack.c.l.b16 %v178
        %v205 = vunpack.c.l.b16 %v179
        %v206 = vunpack.c.l.b16 %v180
        %v207 = vpack.c.b16 %v200, %v199
        %v208 = vpack.c.b16 %v202, %v201
        %v209 = vpack.c.b16 %v204, %v203
        %v210 = vpack.c.b16 %v206, %v205
        %v217 = vunpack.c.l.b16 %v181
        %v218 = vunpack.c.l.b16 %v182
        %v219 = vunpack.c.l.b16 %v183
        %v220 = vunpack.c.l.b16 %v184
        %v221 = vunpack.c.l.b16 %v185
        %v222 = vunpack.c.l.b16 %v186
        %v223 = vpack.c.b16 %v218, %v217
        %v224 = vpack.c.b16 %v220, %v219
        %v225 = vpack.c.b16 %v222, %v221
        %vm229 = vcmask 392192
        %v231 = vsel %vm229, %v207, 0
        %v234 = vsel %vm229, %v208, 0
        %v237 = vsel %vm229, %v209, 0
        %v240 = vsel %vm229, %v210, 0
        %242 = vmatpush.bf16.msra.mxu0 0
        %243 = vmatpush.bf16.msra.mxu0 0
        %244 = vmatpush.bf16.msra.mxu0 0
        %245 = vmatpush.bf16.msra.mxu0 0
        %246 = vmatpush.bf16.msra.mxu0 0
        %247 = vmatpush.bf16.msra.mxu0 %v225
        %248 = vmatpush.bf16.msra.mxu0 %v224
        %249 = vmatpush.bf16.msra.mxu0 %v223
        %250 = vmatmul.bf16.gmra.mxu0 %v231
        %v251 = vpop.f32.mrf.mxu0
        %v252 = vadd.f32 %v189, %v251
        %v253 = vpop.f32.mrf.mxu0
        %v254 = vadd.f32 %v189, %v253
        %255 = vmatmul.bf16.gmra.mxu0 %v234
        %v256 = vpop.f32.mrf.mxu0
        %v257 = vadd.f32 %v189, %v256
        %v258 = vpop.f32.mrf.mxu0
        %v259 = vadd.f32 %v189, %v258
        %260 = vmatmul.bf16.gmra.mxu0 %v237
        %v261 = vpop.f32.mrf.mxu0
        %v262 = vadd.f32 %v189, %v261
        %v263 = vpop.f32.mrf.mxu0
        %v264 = vadd.f32 %v189, %v263
        %265 = vmatmul.bf16.gmra.mxu0 %v240
        %v266 = vpop.f32.mrf.mxu0
        %v267 = vadd.f32 %v189, %v266
        %v268 = vpop.f32.mrf.mxu0
        %v269 = vadd.f32 %v189, %v268
        %270 = vdwg.mxu0
        %271 = vst [vmem:[%s164] sm:$0xff] %v252
        %272 = vst [vmem:[%s164 + $0x8] sm:$0xff] %v254
        %273 = vst [vmem:[%s164 + $0x10] sm:$0xff] %v257
        %274 = vst [vmem:[%s164 + $0x18] sm:$0xff] %v259
        %275 = vst [vmem:[%s164 + $0x20] sm:$0xff] %v262
        %276 = vst [vmem:[%s164 + $0x28] sm:$0xff] %v264
        %277 = vst [vmem:[%s164 + $0x30] sm:$0xff] %v267
        %278 = vst [vmem:[%s164 + $0x38] sm:$0xff] %v269
        %s279 = sand.u32 %s93, 1
        %s280 = scalar_lea.sflag [#allocation3], %s279
        %s281 = sand.u32 %s93, 1
        %s282 = smul.addr %s281, 64
        %s283 = scalar_lea.vmem [#allocation2], %s282
        // Predicated region
        $region33: #{tpu_custom_call.1} parent=31 // pred_check
          %p284 = pneg %p103
        $region34: #{tpu_custom_call.1} parent=31 // pred_check_branch
          %286 = sbr.rel (%p284) target = $region36
        $region35: #{tpu_custom_call.1} parent=31 // pred_region
          %s287 = smul.u32 8, %s17
          %289 = vsyncadd %s280, 0
          %s290 = smul.addr %s287, 8
          %s291 = scalar_lea.hbm %s3, %s290
          %s292 = sshll.u32 %s283, 4
          %s293 = int_to_ptr.vmem [resolvable:$true] %s292
          %s294 = sshll.u32 %s291, 4
          %s295 = int_to_ptr.hbm [resolvable:$true] %s294
          %300 = dma.vmem_to_hbm [thread:$0]  %s293, 1024, %s295, %s280, 128, 128, 8
        $region36: #{tpu_custom_call.1} parent=31 // pred_fallthru
          _
      $region32: #{tpu_custom_call.1} parent=5 // pred_fallthru
        _
      %p301 = scmp.le.s32.totalorder 2, %s12
      // Predicated region
      $region37: #{tpu_custom_call.1} parent=5 // pred_check
        %p302 = pneg %p301
      $region38: #{tpu_custom_call.1} parent=5 // pred_check_branch
        %304 = sbr.rel (%p302) target = $region40
      $region39: #{tpu_custom_call.1} parent=5 // pred_region
        %s305 = ssub.s32 %s12, 2
        // Predicated region
        $region41: #{tpu_custom_call.1} parent=39 // pred_check
          %p306 = pneg %p109
        $region42: #{tpu_custom_call.1} parent=39 // pred_check_branch
          %308 = sbr.rel (%p306) target = $region44
        $region43: #{tpu_custom_call.1} parent=39 // pred_region
          %s309 = sand.u32 %s94, 1
          %s310 = scalar_lea.sflag [#allocation3], %s309
          %s311 = sand.u32 %s94, 1
          %s312 = smul.addr %s311, 64
          %s313 = scalar_lea.vmem [#allocation2], %s312
          %315 = dma.done %s310, 1024
        $region44: #{tpu_custom_call.1} parent=39 // pred_fallthru
          _
      $region40: #{tpu_custom_call.1} parent=5 // pred_fallthru
        _
    $region6: #{tpu_custom_call.1} parent=1 // loop_footer
      %s16 = sadd.s32 1, %s12
    $region7: #{tpu_custom_call.1} parent=1 // loop_footer_branch
      %11 = sbr.rel target = $region3
    $region8: #{tpu_custom_call.1} parent=1 // loop_exit
      _
    %316 = vsyncpa [#allocation3], 1
    %s317 = scalar_lea.sflag [#allocation3], 1
    %318 = vsyncpa %s317, 1

</llo_original>
